<compile_context>
chip_gen: v7x
topology: tpu7x:2x2x1
jax: 0.10.0
libtpu: 0.0.40
codegen_flags: <defaults>
</compile_context>

<pallas_src>
import functools

import jax
import jax.numpy as jnp
from jax import lax
from jax.experimental import pallas as pl
from jax.experimental.pallas import tpu as pltpu


def _objness_kernel(gt_ref, p_ref, obj_ref, *, ignore_iou_thresh, num_gt):
    """Objectness targets for one (batch, anchor-tile) grid step.

    gt_ref : (B, 4*M)       ground-truth boxes, flat per batch, in SMEM
    p_ref  : (1, 4, R, 128) predicted boxes, coordinate-major, lane-dense
    obj_ref: (1, R, 128)    objectness target (0 or -1)
    """
    b = pl.program_id(0)

    # f32 math regardless of input dtype (v5e has no native bf16 VPU/EUP).
    px1 = p_ref[0, 0, :, :].astype(jnp.float32)
    py1 = p_ref[0, 1, :, :].astype(jnp.float32)
    px2 = p_ref[0, 2, :, :].astype(jnp.float32)
    py2 = p_ref[0, 3, :, :].astype(jnp.float32)
    area_p = (px2 - px1) * (py2 - py1)

    thr = jnp.float32(ignore_iou_thresh)
    eps = jnp.float32(1e-15)   # BBoxBatchIOU eps

    def body(j, best):
        base = 4 * j
        gx1 = gt_ref[b, base + 0]
        gy1 = gt_ref[b, base + 1]
        gx2 = gt_ref[b, base + 2]
        gy2 = gt_ref[b, base + 3]
        iw = jnp.maximum(jnp.minimum(px2, gx2) - jnp.maximum(px1, gx1), 0.0)
        ih = jnp.maximum(jnp.minimum(py2, gy2) - jnp.maximum(py1, gy1), 0.0)
        inter = iw * ih
        area_g = (gx2 - gx1) * (gy2 - gy1)
        union = area_p + area_g - inter
        # Divide-free threshold test (no EUP divide in the hot loop):
        #   inter/(union+eps) > thr   <=>   inter - thr*(union+eps) > 0
        # valid because union + eps > 0 for well-formed corner boxes.
        score = inter - thr * (union + eps)
        return jnp.maximum(best, score)

    init = jnp.full(area_p.shape, -jnp.inf, jnp.float32)
    if num_gt <= 32:
        # Small M: unroll at trace time for full LLO scheduler visibility.
        best = init
        for j in range(num_gt):
            best = body(j, best)
    else:
        best = lax.fori_loop(0, num_gt, body, init, unroll=8)

    obj = jnp.where(best > 0.0, jnp.float32(-1.0), jnp.float32(0.0))
    obj_ref[0, :, :] = obj.astype(obj_ref.dtype)


def yolo_v3_dynamic_target_simple(box_preds, gt_boxes, *, num_class,
                                  ignore_iou_thresh, n_tile=4096):
    """JAX/Pallas equivalent of YOLOV3DynamicTargetGeneratorSimple.forward."""
    b = box_preds.shape[0]
    bp = box_preds.reshape(b, -1, 4)            # (B, N, 4)
    n = bp.shape[1]
    m = gt_boxes.shape[1]
    dtype = bp.dtype

    # Pad N to a multiple of 128 so anchors pack into full (sublane, 128-lane)
    # tiles.  Zero-padded boxes have zero area -> IOU 0 -> objness 0, sliced off.
    n_pad = (-n) % 128
    if n_pad:
        bp_k = jnp.concatenate([bp, jnp.zeros((b, n_pad, 4), dtype)], axis=1)
    else:
        bp_k = bp
    n_total = n + n_pad
    rows = n_total // 128

    # Coordinate-major, anchors packed lane-dense: (B, 4, rows, 128).
    p4 = jnp.transpose(bp_k, (0, 2, 1)).reshape(b, 4, rows, 128)

    # Ground-truth boxes as a small flat SMEM array (B, 4*M), f32.
    gt_flat = gt_boxes.astype(jnp.float32).reshape(b, m * 4)

    # Anchor tile: ~n_tile anchors / step, rows multiple of 8 (or full extent).
    cap = max(8, ((n_tile // 128) // 8) * 8)
    r_tile = min(cap, rows)
    grid = (b, pl.cdiv(rows, r_tile))

    kernel = functools.partial(_objness_kernel,
                               ignore_iou_thresh=float(ignore_iou_thresh),
                               num_gt=m)

    obj = pl.pallas_call(
        kernel,
        out_shape=jax.ShapeDtypeStruct((b, rows, 128), dtype),
        grid=grid,
        in_specs=[
            pl.BlockSpec(memory_space=pltpu.MemorySpace.SMEM),       # gt boxes
            pl.BlockSpec((1, 4, r_tile, 128), lambda i, j: (i, 0, j, 0)),
        ],
        out_specs=pl.BlockSpec((1, r_tile, 128), lambda i, j: (i, j, 0)),
        compiler_params=pltpu.CompilerParams(
            dimension_semantics=("parallel", "parallel")),
    )(gt_flat, p4)

    objness_t = obj.reshape(b, n_total, 1)[:, :n, :]     # (B, N, 1)
    center_t = jnp.zeros((b, n, 2), dtype)
    scale_t = jnp.zeros((b, n, 2), dtype)
    weight_t = jnp.zeros((b, n, 2), dtype)
    class_t = jnp.full((b, n, num_class), -1.0, dtype)
    return objness_t, center_t, scale_t, weight_t, class_t


def _reference(box_preds, gt_boxes, *, ignore_iou_thresh):
    """Pure-JAX reference of the torch forward (objectness only)."""
    b = box_preds.shape[0]
    bp = box_preds.reshape(b, -1, 4)
    px1, py1, px2, py2 = [bp[..., i:i + 1] for i in range(4)]        # (B,N,1)
    gx1, gy1, gx2, gy2 = [gt_boxes[..., i] for i in range(4)]        # (B,M)
    iw = jnp.maximum(
        jnp.minimum(px2, gx2[:, None, :]) - jnp.maximum(px1, gx1[:, None, :]),
        0.0)
    ih = jnp.maximum(
        jnp.minimum(py2, gy2[:, None, :]) - jnp.maximum(py1, gy1[:, None, :]),
        0.0)
    inter = iw * ih
    area_p = (px2 - px1) * (py2 - py1)
    area_g = ((gx2 - gx1) * (gy2 - gy1))[:, None, :]
    iou = inter / (area_p + area_g - inter + 1e-15)
    ious_max = jnp.max(iou, axis=-1, keepdims=True)
    return (ious_max > ignore_iou_thresh).astype(bp.dtype) * -1.0


if __name__ == "__main__":
    num_class = 4
    ignore_iou_thresh = 0.5

    key = jax.random.PRNGKey(0)
    k1, k2, k3, k4 = jax.random.split(key, 4)

    # box_preds like a YOLO head output: (B=2, anchors*H=8, W=16, 4) -> N=128
    b, a_h, w = 2, 8, 16
    n = a_h * w
    m = 8  # number of gt boxes

    # Build well-formed corner boxes (x1<x2, y1<y2) in [0, 1].
    p_c = jax.random.uniform(k1, (b, a_h, w, 2), jnp.float32)
    p_s = jax.random.uniform(k2, (b, a_h, w, 2), jnp.float32) * 0.3 + 0.02
    box_preds = jnp.concatenate([p_c - p_s * 0.5, p_c + p_s * 0.5], axis=-1)

    g_c = jax.random.uniform(k3, (b, m, 2), jnp.float32)
    g_s = jax.random.uniform(k4, (b, m, 2), jnp.float32) * 0.3 + 0.02
    gt_boxes = jnp.concatenate([g_c - g_s * 0.5, g_c + g_s * 0.5], axis=-1)

    fwd = jax.jit(functools.partial(yolo_v3_dynamic_target_simple,
                                    num_class=num_class,
                                    ignore_iou_thresh=ignore_iou_thresh))

    outs = jax.block_until_ready(fwd(box_preds, gt_boxes))
    objness_t, center_t, scale_t, weight_t, class_t = outs

    # Shape checks mirroring the torch module.
    assert objness_t.shape == (b, n, 1)
    assert center_t.shape == (b, n, 2)
    assert scale_t.shape == (b, n, 2)
    assert weight_t.shape == (b, n, 2)
    assert class_t.shape == (b, n, num_class)

    # Numerical check against a pure-JAX reference.
    ref_obj = _reference(box_preds, gt_boxes,
                         ignore_iou_thresh=ignore_iou_thresh)
    assert jnp.allclose(objness_t, ref_obj), "objness mismatch vs reference"
    assert jnp.all(center_t == 0) and jnp.all(scale_t == 0)
    assert jnp.all(weight_t == 0) and jnp.all(class_t == -1)

    print("KERNEL_OK")
</pallas_src>

<mosaic_0001>
module attributes {stable_mosaic.version = 11 : i64} {
  func.func @_objness_kernel(%arg0: i32, %arg1: i32, %arg2: memref<2x32xf32, #tpu.memory_space<smem>>, %arg3: memref<1x4x1x128xf32, #tpu.memory_space<vmem>>, %arg4: memref<1x1x128xf32, #tpu.memory_space<vmem>>) attributes {dimension_semantics = [#tpu.dimension_semantics<parallel>, #tpu.dimension_semantics<parallel>], iteration_bounds = array<i64: 2, 1>, scalar_prefetch = 0 : i64, scratch_operands = 0 : i64, tpu.core_type = #tpu.core_type<tc>, window_params = [{transform_indices = @transform_0, window_bounds = array<i64: 2, 32>}, {transform_indices = @transform_1, window_bounds = array<i64: 1, 4, 1, 128>}, {transform_indices = @transform_2, window_bounds = array<i64: 1, 1, 128>}]} {
    %c0 = arith.constant 0 : index
    %c0_0 = arith.constant 0 : index
    %c0_1 = arith.constant 0 : index
    %c0_2 = arith.constant 0 : index
    %0 = vector.load %arg3[%c0, %c0_0, %c0_1, %c0_2] : memref<1x4x1x128xf32, #tpu.memory_space<vmem>>, vector<1x1x1x128xf32>
    %1 = vector.shape_cast %0 : vector<1x1x1x128xf32> to vector<1x128xf32>
    %c0_3 = arith.constant 0 : index
    %c1 = arith.constant 1 : index
    %c0_4 = arith.constant 0 : index
    %c0_5 = arith.constant 0 : index
    %2 = vector.load %arg3[%c0_3, %c1, %c0_4, %c0_5] : memref<1x4x1x128xf32, #tpu.memory_space<vmem>>, vector<1x1x1x128xf32>
    %3 = vector.shape_cast %2 : vector<1x1x1x128xf32> to vector<1x128xf32>
    %c0_6 = arith.constant 0 : index
    %c2 = arith.constant 2 : index
    %c0_7 = arith.constant 0 : index
    %c0_8 = arith.constant 0 : index
    %4 = vector.load %arg3[%c0_6, %c2, %c0_7, %c0_8] : memref<1x4x1x128xf32, #tpu.memory_space<vmem>>, vector<1x1x1x128xf32>
    %5 = vector.shape_cast %4 : vector<1x1x1x128xf32> to vector<1x128xf32>
    %c0_9 = arith.constant 0 : index
    %c3 = arith.constant 3 : index
    %c0_10 = arith.constant 0 : index
    %c0_11 = arith.constant 0 : index
    %6 = vector.load %arg3[%c0_9, %c3, %c0_10, %c0_11] : memref<1x4x1x128xf32, #tpu.memory_space<vmem>>, vector<1x1x1x128xf32>
    %7 = vector.shape_cast %6 : vector<1x1x1x128xf32> to vector<1x128xf32>
    %8 = arith.subf %5, %1 : vector<1x128xf32>
    %9 = arith.subf %7, %3 : vector<1x128xf32>
    %10 = arith.mulf %8, %9 : vector<1x128xf32>
    %cst = arith.constant 0xFF800000 : f32
    %11 = vector.broadcast %cst : f32 to vector<1x128xf32>
    %12 = arith.index_cast %arg0 : i32 to index
    %c0_12 = arith.constant 0 : index
    %13 = memref.load %arg2[%12, %c0_12] : memref<2x32xf32, #tpu.memory_space<smem>>
    %14 = arith.index_cast %arg0 : i32 to index
    %c1_13 = arith.constant 1 : index
    %15 = memref.load %arg2[%14, %c1_13] : memref<2x32xf32, #tpu.memory_space<smem>>
    %16 = arith.index_cast %arg0 : i32 to index
    %c2_14 = arith.constant 2 : index
    %17 = memref.load %arg2[%16, %c2_14] : memref<2x32xf32, #tpu.memory_space<smem>>
    %18 = arith.index_cast %arg0 : i32 to index
    %c3_15 = arith.constant 3 : index
    %19 = memref.load %arg2[%18, %c3_15] : memref<2x32xf32, #tpu.memory_space<smem>>
    %20 = vector.broadcast %17 : f32 to vector<1x128xf32>
    %21 = arith.minimumf %5, %20 : vector<1x128xf32>
    %22 = vector.broadcast %13 : f32 to vector<1x128xf32>
    %23 = arith.maximumf %1, %22 : vector<1x128xf32>
    %24 = arith.subf %21, %23 : vector<1x128xf32>
    %cst_16 = arith.constant 0.000000e+00 : f32
    %25 = vector.broadcast %cst_16 : f32 to vector<1x128xf32>
    %26 = arith.maximumf %24, %25 : vector<1x128xf32>
    %27 = vector.broadcast %19 : f32 to vector<1x128xf32>
    %28 = arith.minimumf %7, %27 : vector<1x128xf32>
    %29 = vector.broadcast %15 : f32 to vector<1x128xf32>
    %30 = arith.maximumf %3, %29 : vector<1x128xf32>
    %31 = arith.subf %28, %30 : vector<1x128xf32>
    %cst_17 = arith.constant 0.000000e+00 : f32
    %32 = vector.broadcast %cst_17 : f32 to vector<1x128xf32>
    %33 = arith.maximumf %31, %32 : vector<1x128xf32>
    %34 = arith.mulf %26, %33 : vector<1x128xf32>
    %35 = arith.subf %17, %13 : f32
    %36 = arith.subf %19, %15 : f32
    %37 = arith.mulf %35, %36 : f32
    %38 = vector.broadcast %37 : f32 to vector<1x128xf32>
    %39 = arith.addf %10, %38 : vector<1x128xf32>
    %40 = arith.subf %39, %34 : vector<1x128xf32>
    %cst_18 = arith.constant 1.000000e-15 : f32
    %41 = vector.broadcast %cst_18 : f32 to vector<1x128xf32>
    %42 = arith.addf %40, %41 : vector<1x128xf32>
    %cst_19 = arith.constant 5.000000e-01 : f32
    %43 = vector.broadcast %cst_19 : f32 to vector<1x128xf32>
    %44 = arith.mulf %43, %42 : vector<1x128xf32>
    %45 = arith.subf %34, %44 : vector<1x128xf32>
    %46 = arith.maximumf %11, %45 : vector<1x128xf32>
    %47 = arith.index_cast %arg0 : i32 to index
    %c4 = arith.constant 4 : index
    %48 = memref.load %arg2[%47, %c4] : memref<2x32xf32, #tpu.memory_space<smem>>
    %49 = arith.index_cast %arg0 : i32 to index
    %c5 = arith.constant 5 : index
    %50 = memref.load %arg2[%49, %c5] : memref<2x32xf32, #tpu.memory_space<smem>>
    %51 = arith.index_cast %arg0 : i32 to index
    %c6 = arith.constant 6 : index
    %52 = memref.load %arg2[%51, %c6] : memref<2x32xf32, #tpu.memory_space<smem>>
    %53 = arith.index_cast %arg0 : i32 to index
    %c7 = arith.constant 7 : index
    %54 = memref.load %arg2[%53, %c7] : memref<2x32xf32, #tpu.memory_space<smem>>
    %55 = vector.broadcast %52 : f32 to vector<1x128xf32>
    %56 = arith.minimumf %5, %55 : vector<1x128xf32>
    %57 = vector.broadcast %48 : f32 to vector<1x128xf32>
    %58 = arith.maximumf %1, %57 : vector<1x128xf32>
    %59 = arith.subf %56, %58 : vector<1x128xf32>
    %cst_20 = arith.constant 0.000000e+00 : f32
    %60 = vector.broadcast %cst_20 : f32 to vector<1x128xf32>
    %61 = arith.maximumf %59, %60 : vector<1x128xf32>
    %62 = vector.broadcast %54 : f32 to vector<1x128xf32>
    %63 = arith.minimumf %7, %62 : vector<1x128xf32>
    %64 = vector.broadcast %50 : f32 to vector<1x128xf32>
    %65 = arith.maximumf %3, %64 : vector<1x128xf32>
    %66 = arith.subf %63, %65 : vector<1x128xf32>
    %cst_21 = arith.constant 0.000000e+00 : f32
    %67 = vector.broadcast %cst_21 : f32 to vector<1x128xf32>
    %68 = arith.maximumf %66, %67 : vector<1x128xf32>
    %69 = arith.mulf %61, %68 : vector<1x128xf32>
    %70 = arith.subf %52, %48 : f32
    %71 = arith.subf %54, %50 : f32
    %72 = arith.mulf %70, %71 : f32
    %73 = vector.broadcast %72 : f32 to vector<1x128xf32>
    %74 = arith.addf %10, %73 : vector<1x128xf32>
    %75 = arith.subf %74, %69 : vector<1x128xf32>
    %cst_22 = arith.constant 1.000000e-15 : f32
    %76 = vector.broadcast %cst_22 : f32 to vector<1x128xf32>
    %77 = arith.addf %75, %76 : vector<1x128xf32>
    %cst_23 = arith.constant 5.000000e-01 : f32
    %78 = vector.broadcast %cst_23 : f32 to vector<1x128xf32>
    %79 = arith.mulf %78, %77 : vector<1x128xf32>
    %80 = arith.subf %69, %79 : vector<1x128xf32>
    %81 = arith.maximumf %46, %80 : vector<1x128xf32>
    %82 = arith.index_cast %arg0 : i32 to index
    %c8 = arith.constant 8 : index
    %83 = memref.load %arg2[%82, %c8] : memref<2x32xf32, #tpu.memory_space<smem>>
    %84 = arith.index_cast %arg0 : i32 to index
    %c9 = arith.constant 9 : index
    %85 = memref.load %arg2[%84, %c9] : memref<2x32xf32, #tpu.memory_space<smem>>
    %86 = arith.index_cast %arg0 : i32 to index
    %c10 = arith.constant 10 : index
    %87 = memref.load %arg2[%86, %c10] : memref<2x32xf32, #tpu.memory_space<smem>>
    %88 = arith.index_cast %arg0 : i32 to index
    %c11 = arith.constant 11 : index
    %89 = memref.load %arg2[%88, %c11] : memref<2x32xf32, #tpu.memory_space<smem>>
    %90 = vector.broadcast %87 : f32 to vector<1x128xf32>
    %91 = arith.minimumf %5, %90 : vector<1x128xf32>
    %92 = vector.broadcast %83 : f32 to vector<1x128xf32>
    %93 = arith.maximumf %1, %92 : vector<1x128xf32>
    %94 = arith.subf %91, %93 : vector<1x128xf32>
    %cst_24 = arith.constant 0.000000e+00 : f32
    %95 = vector.broadcast %cst_24 : f32 to vector<1x128xf32>
    %96 = arith.maximumf %94, %95 : vector<1x128xf32>
    %97 = vector.broadcast %89 : f32 to vector<1x128xf32>
    %98 = arith.minimumf %7, %97 : vector<1x128xf32>
    %99 = vector.broadcast %85 : f32 to vector<1x128xf32>
    %100 = arith.maximumf %3, %99 : vector<1x128xf32>
    %101 = arith.subf %98, %100 : vector<1x128xf32>
    %cst_25 = arith.constant 0.000000e+00 : f32
    %102 = vector.broadcast %cst_25 : f32 to vector<1x128xf32>
    %103 = arith.maximumf %101, %102 : vector<1x128xf32>
    %104 = arith.mulf %96, %103 : vector<1x128xf32>
    %105 = arith.subf %87, %83 : f32
    %106 = arith.subf %89, %85 : f32
    %107 = arith.mulf %105, %106 : f32
    %108 = vector.broadcast %107 : f32 to vector<1x128xf32>
    %109 = arith.addf %10, %108 : vector<1x128xf32>
    %110 = arith.subf %109, %104 : vector<1x128xf32>
    %cst_26 = arith.constant 1.000000e-15 : f32
    %111 = vector.broadcast %cst_26 : f32 to vector<1x128xf32>
    %112 = arith.addf %110, %111 : vector<1x128xf32>
    %cst_27 = arith.constant 5.000000e-01 : f32
    %113 = vector.broadcast %cst_27 : f32 to vector<1x128xf32>
    %114 = arith.mulf %113, %112 : vector<1x128xf32>
    %115 = arith.subf %104, %114 : vector<1x128xf32>
    %116 = arith.maximumf %81, %115 : vector<1x128xf32>
    %117 = arith.index_cast %arg0 : i32 to index
    %c12 = arith.constant 12 : index
    %118 = memref.load %arg2[%117, %c12] : memref<2x32xf32, #tpu.memory_space<smem>>
    %119 = arith.index_cast %arg0 : i32 to index
    %c13 = arith.constant 13 : index
    %120 = memref.load %arg2[%119, %c13] : memref<2x32xf32, #tpu.memory_space<smem>>
    %121 = arith.index_cast %arg0 : i32 to index
    %c14 = arith.constant 14 : index
    %122 = memref.load %arg2[%121, %c14] : memref<2x32xf32, #tpu.memory_space<smem>>
    %123 = arith.index_cast %arg0 : i32 to index
    %c15 = arith.constant 15 : index
    %124 = memref.load %arg2[%123, %c15] : memref<2x32xf32, #tpu.memory_space<smem>>
    %125 = vector.broadcast %122 : f32 to vector<1x128xf32>
    %126 = arith.minimumf %5, %125 : vector<1x128xf32>
    %127 = vector.broadcast %118 : f32 to vector<1x128xf32>
    %128 = arith.maximumf %1, %127 : vector<1x128xf32>
    %129 = arith.subf %126, %128 : vector<1x128xf32>
    %cst_28 = arith.constant 0.000000e+00 : f32
    %130 = vector.broadcast %cst_28 : f32 to vector<1x128xf32>
    %131 = arith.maximumf %129, %130 : vector<1x128xf32>
    %132 = vector.broadcast %124 : f32 to vector<1x128xf32>
    %133 = arith.minimumf %7, %132 : vector<1x128xf32>
    %134 = vector.broadcast %120 : f32 to vector<1x128xf32>
    %135 = arith.maximumf %3, %134 : vector<1x128xf32>
    %136 = arith.subf %133, %135 : vector<1x128xf32>
    %cst_29 = arith.constant 0.000000e+00 : f32
    %137 = vector.broadcast %cst_29 : f32 to vector<1x128xf32>
    %138 = arith.maximumf %136, %137 : vector<1x128xf32>
    %139 = arith.mulf %131, %138 : vector<1x128xf32>
    %140 = arith.subf %122, %118 : f32
    %141 = arith.subf %124, %120 : f32
    %142 = arith.mulf %140, %141 : f32
    %143 = vector.broadcast %142 : f32 to vector<1x128xf32>
    %144 = arith.addf %10, %143 : vector<1x128xf32>
    %145 = arith.subf %144, %139 : vector<1x128xf32>
    %cst_30 = arith.constant 1.000000e-15 : f32
    %146 = vector.broadcast %cst_30 : f32 to vector<1x128xf32>
    %147 = arith.addf %145, %146 : vector<1x128xf32>
    %cst_31 = arith.constant 5.000000e-01 : f32
    %148 = vector.broadcast %cst_31 : f32 to vector<1x128xf32>
    %149 = arith.mulf %148, %147 : vector<1x128xf32>
    %150 = arith.subf %139, %149 : vector<1x128xf32>
    %151 = arith.maximumf %116, %150 : vector<1x128xf32>
    %152 = arith.index_cast %arg0 : i32 to index
    %c16 = arith.constant 16 : index
    %153 = memref.load %arg2[%152, %c16] : memref<2x32xf32, #tpu.memory_space<smem>>
    %154 = arith.index_cast %arg0 : i32 to index
    %c17 = arith.constant 17 : index
    %155 = memref.load %arg2[%154, %c17] : memref<2x32xf32, #tpu.memory_space<smem>>
    %156 = arith.index_cast %arg0 : i32 to index
    %c18 = arith.constant 18 : index
    %157 = memref.load %arg2[%156, %c18] : memref<2x32xf32, #tpu.memory_space<smem>>
    %158 = arith.index_cast %arg0 : i32 to index
    %c19 = arith.constant 19 : index
    %159 = memref.load %arg2[%158, %c19] : memref<2x32xf32, #tpu.memory_space<smem>>
    %160 = vector.broadcast %157 : f32 to vector<1x128xf32>
    %161 = arith.minimumf %5, %160 : vector<1x128xf32>
    %162 = vector.broadcast %153 : f32 to vector<1x128xf32>
    %163 = arith.maximumf %1, %162 : vector<1x128xf32>
    %164 = arith.subf %161, %163 : vector<1x128xf32>
    %cst_32 = arith.constant 0.000000e+00 : f32
    %165 = vector.broadcast %cst_32 : f32 to vector<1x128xf32>
    %166 = arith.maximumf %164, %165 : vector<1x128xf32>
    %167 = vector.broadcast %159 : f32 to vector<1x128xf32>
    %168 = arith.minimumf %7, %167 : vector<1x128xf32>
    %169 = vector.broadcast %155 : f32 to vector<1x128xf32>
    %170 = arith.maximumf %3, %169 : vector<1x128xf32>
    %171 = arith.subf %168, %170 : vector<1x128xf32>
    %cst_33 = arith.constant 0.000000e+00 : f32
    %172 = vector.broadcast %cst_33 : f32 to vector<1x128xf32>
    %173 = arith.maximumf %171, %172 : vector<1x128xf32>
    %174 = arith.mulf %166, %173 : vector<1x128xf32>
    %175 = arith.subf %157, %153 : f32
    %176 = arith.subf %159, %155 : f32
    %177 = arith.mulf %175, %176 : f32
    %178 = vector.broadcast %177 : f32 to vector<1x128xf32>
    %179 = arith.addf %10, %178 : vector<1x128xf32>
    %180 = arith.subf %179, %174 : vector<1x128xf32>
    %cst_34 = arith.constant 1.000000e-15 : f32
    %181 = vector.broadcast %cst_34 : f32 to vector<1x128xf32>
    %182 = arith.addf %180, %181 : vector<1x128xf32>
    %cst_35 = arith.constant 5.000000e-01 : f32
    %183 = vector.broadcast %cst_35 : f32 to vector<1x128xf32>
    %184 = arith.mulf %183, %182 : vector<1x128xf32>
    %185 = arith.subf %174, %184 : vector<1x128xf32>
    %186 = arith.maximumf %151, %185 : vector<1x128xf32>
    %187 = arith.index_cast %arg0 : i32 to index
    %c20 = arith.constant 20 : index
    %188 = memref.load %arg2[%187, %c20] : memref<2x32xf32, #tpu.memory_space<smem>>
    %189 = arith.index_cast %arg0 : i32 to index
    %c21 = arith.constant 21 : index
    %190 = memref.load %arg2[%189, %c21] : memref<2x32xf32, #tpu.memory_space<smem>>
    %191 = arith.index_cast %arg0 : i32 to index
    %c22 = arith.constant 22 : index
    %192 = memref.load %arg2[%191, %c22] : memref<2x32xf32, #tpu.memory_space<smem>>
    %193 = arith.index_cast %arg0 : i32 to index
    %c23 = arith.constant 23 : index
    %194 = memref.load %arg2[%193, %c23] : memref<2x32xf32, #tpu.memory_space<smem>>
    %195 = vector.broadcast %192 : f32 to vector<1x128xf32>
    %196 = arith.minimumf %5, %195 : vector<1x128xf32>
    %197 = vector.broadcast %188 : f32 to vector<1x128xf32>
    %198 = arith.maximumf %1, %197 : vector<1x128xf32>
    %199 = arith.subf %196, %198 : vector<1x128xf32>
    %cst_36 = arith.constant 0.000000e+00 : f32
    %200 = vector.broadcast %cst_36 : f32 to vector<1x128xf32>
    %201 = arith.maximumf %199, %200 : vector<1x128xf32>
    %202 = vector.broadcast %194 : f32 to vector<1x128xf32>
    %203 = arith.minimumf %7, %202 : vector<1x128xf32>
    %204 = vector.broadcast %190 : f32 to vector<1x128xf32>
    %205 = arith.maximumf %3, %204 : vector<1x128xf32>
    %206 = arith.subf %203, %205 : vector<1x128xf32>
    %cst_37 = arith.constant 0.000000e+00 : f32
    %207 = vector.broadcast %cst_37 : f32 to vector<1x128xf32>
    %208 = arith.maximumf %206, %207 : vector<1x128xf32>
    %209 = arith.mulf %201, %208 : vector<1x128xf32>
    %210 = arith.subf %192, %188 : f32
    %211 = arith.subf %194, %190 : f32
    %212 = arith.mulf %210, %211 : f32
    %213 = vector.broadcast %212 : f32 to vector<1x128xf32>
    %214 = arith.addf %10, %213 : vector<1x128xf32>
    %215 = arith.subf %214, %209 : vector<1x128xf32>
    %cst_38 = arith.constant 1.000000e-15 : f32
    %216 = vector.broadcast %cst_38 : f32 to vector<1x128xf32>
    %217 = arith.addf %215, %216 : vector<1x128xf32>
    %cst_39 = arith.constant 5.000000e-01 : f32
    %218 = vector.broadcast %cst_39 : f32 to vector<1x128xf32>
    %219 = arith.mulf %218, %217 : vector<1x128xf32>
    %220 = arith.subf %209, %219 : vector<1x128xf32>
    %221 = arith.maximumf %186, %220 : vector<1x128xf32>
    %222 = arith.index_cast %arg0 : i32 to index
    %c24 = arith.constant 24 : index
    %223 = memref.load %arg2[%222, %c24] : memref<2x32xf32, #tpu.memory_space<smem>>
    %224 = arith.index_cast %arg0 : i32 to index
    %c25 = arith.constant 25 : index
    %225 = memref.load %arg2[%224, %c25] : memref<2x32xf32, #tpu.memory_space<smem>>
    %226 = arith.index_cast %arg0 : i32 to index
    %c26 = arith.constant 26 : index
    %227 = memref.load %arg2[%226, %c26] : memref<2x32xf32, #tpu.memory_space<smem>>
    %228 = arith.index_cast %arg0 : i32 to index
    %c27 = arith.constant 27 : index
    %229 = memref.load %arg2[%228, %c27] : memref<2x32xf32, #tpu.memory_space<smem>>
    %230 = vector.broadcast %227 : f32 to vector<1x128xf32>
    %231 = arith.minimumf %5, %230 : vector<1x128xf32>
    %232 = vector.broadcast %223 : f32 to vector<1x128xf32>
    %233 = arith.maximumf %1, %232 : vector<1x128xf32>
    %234 = arith.subf %231, %233 : vector<1x128xf32>
    %cst_40 = arith.constant 0.000000e+00 : f32
    %235 = vector.broadcast %cst_40 : f32 to vector<1x128xf32>
    %236 = arith.maximumf %234, %235 : vector<1x128xf32>
    %237 = vector.broadcast %229 : f32 to vector<1x128xf32>
    %238 = arith.minimumf %7, %237 : vector<1x128xf32>
    %239 = vector.broadcast %225 : f32 to vector<1x128xf32>
    %240 = arith.maximumf %3, %239 : vector<1x128xf32>
    %241 = arith.subf %238, %240 : vector<1x128xf32>
    %cst_41 = arith.constant 0.000000e+00 : f32
    %242 = vector.broadcast %cst_41 : f32 to vector<1x128xf32>
    %243 = arith.maximumf %241, %242 : vector<1x128xf32>
    %244 = arith.mulf %236, %243 : vector<1x128xf32>
    %245 = arith.subf %227, %223 : f32
    %246 = arith.subf %229, %225 : f32
    %247 = arith.mulf %245, %246 : f32
    %248 = vector.broadcast %247 : f32 to vector<1x128xf32>
    %249 = arith.addf %10, %248 : vector<1x128xf32>
    %250 = arith.subf %249, %244 : vector<1x128xf32>
    %cst_42 = arith.constant 1.000000e-15 : f32
    %251 = vector.broadcast %cst_42 : f32 to vector<1x128xf32>
    %252 = arith.addf %250, %251 : vector<1x128xf32>
    %cst_43 = arith.constant 5.000000e-01 : f32
    %253 = vector.broadcast %cst_43 : f32 to vector<1x128xf32>
    %254 = arith.mulf %253, %252 : vector<1x128xf32>
    %255 = arith.subf %244, %254 : vector<1x128xf32>
    %256 = arith.maximumf %221, %255 : vector<1x128xf32>
    %257 = arith.index_cast %arg0 : i32 to index
    %c28 = arith.constant 28 : index
    %258 = memref.load %arg2[%257, %c28] : memref<2x32xf32, #tpu.memory_space<smem>>
    %259 = arith.index_cast %arg0 : i32 to index
    %c29 = arith.constant 29 : index
    %260 = memref.load %arg2[%259, %c29] : memref<2x32xf32, #tpu.memory_space<smem>>
    %261 = arith.index_cast %arg0 : i32 to index
    %c30 = arith.constant 30 : index
    %262 = memref.load %arg2[%261, %c30] : memref<2x32xf32, #tpu.memory_space<smem>>
    %263 = arith.index_cast %arg0 : i32 to index
    %c31 = arith.constant 31 : index
    %264 = memref.load %arg2[%263, %c31] : memref<2x32xf32, #tpu.memory_space<smem>>
    %265 = vector.broadcast %262 : f32 to vector<1x128xf32>
    %266 = arith.minimumf %5, %265 : vector<1x128xf32>
    %267 = vector.broadcast %258 : f32 to vector<1x128xf32>
    %268 = arith.maximumf %1, %267 : vector<1x128xf32>
    %269 = arith.subf %266, %268 : vector<1x128xf32>
    %cst_44 = arith.constant 0.000000e+00 : f32
    %270 = vector.broadcast %cst_44 : f32 to vector<1x128xf32>
    %271 = arith.maximumf %269, %270 : vector<1x128xf32>
    %272 = vector.broadcast %264 : f32 to vector<1x128xf32>
    %273 = arith.minimumf %7, %272 : vector<1x128xf32>
    %274 = vector.broadcast %260 : f32 to vector<1x128xf32>
    %275 = arith.maximumf %3, %274 : vector<1x128xf32>
    %276 = arith.subf %273, %275 : vector<1x128xf32>
    %cst_45 = arith.constant 0.000000e+00 : f32
    %277 = vector.broadcast %cst_45 : f32 to vector<1x128xf32>
    %278 = arith.maximumf %276, %277 : vector<1x128xf32>
    %279 = arith.mulf %271, %278 : vector<1x128xf32>
    %280 = arith.subf %262, %258 : f32
    %281 = arith.subf %264, %260 : f32
    %282 = arith.mulf %280, %281 : f32
    %283 = vector.broadcast %282 : f32 to vector<1x128xf32>
    %284 = arith.addf %10, %283 : vector<1x128xf32>
    %285 = arith.subf %284, %279 : vector<1x128xf32>
    %cst_46 = arith.constant 1.000000e-15 : f32
    %286 = vector.broadcast %cst_46 : f32 to vector<1x128xf32>
    %287 = arith.addf %285, %286 : vector<1x128xf32>
    %cst_47 = arith.constant 5.000000e-01 : f32
    %288 = vector.broadcast %cst_47 : f32 to vector<1x128xf32>
    %289 = arith.mulf %288, %287 : vector<1x128xf32>
    %290 = arith.subf %279, %289 : vector<1x128xf32>
    %291 = arith.maximumf %256, %290 : vector<1x128xf32>
    %cst_48 = arith.constant 0.000000e+00 : f32
    %292 = vector.broadcast %cst_48 : f32 to vector<1x128xf32>
    %293 = arith.cmpf ogt, %291, %292 : vector<1x128xf32>
    %cst_49 = arith.constant -1.000000e+00 : f32
    %cst_50 = arith.constant 0.000000e+00 : f32
    %294 = vector.broadcast %cst_49 : f32 to vector<1x128xf32>
    %295 = vector.broadcast %cst_50 : f32 to vector<1x128xf32>
    %296 = arith.select %293, %294, %295 : vector<1x128xi1>, vector<1x128xf32>
    %c0_51 = arith.constant 0 : index
    %c0_52 = arith.constant 0 : index
    %c0_53 = arith.constant 0 : index
    %297 = vector.load %arg4[%c0_51, %c0_52, %c0_53] : memref<1x1x128xf32, #tpu.memory_space<vmem>>, vector<1x1x128xf32>
    %298 = vector.shape_cast %297 : vector<1x1x128xf32> to vector<1x128xf32>
    %299 = vector.shape_cast %296 : vector<1x128xf32> to vector<1x1x128xf32>
    tpu.vector_store %arg4[%c0_51, %c0_52, %c0_53], %299 {strides = array<i32>} : memref<1x1x128xf32, #tpu.memory_space<vmem>>, vector<1x1x128xf32>,
    return
  }
  func.func @transform_0(%arg0: i32, %arg1: i32) -> (i32, i32) {
    %c0_i32 = arith.constant 0 : i32
    %c0_i32_0 = arith.constant 0 : i32
    %c0_i32_1 = arith.constant 0 : i32
    return %c0_i32, %c0_i32_0 : i32, i32
  }
  func.func @transform_1(%arg0: i32, %arg1: i32) -> (i32, i32, i32, i32) {
    %c0_i32 = arith.constant 0 : i32
    %c0_i32_0 = arith.constant 0 : i32
    %c0_i32_1 = arith.constant 0 : i32
    return %arg0, %c0_i32, %arg1, %c0_i32_0 : i32, i32, i32, i32
  }
  func.func @transform_2(%arg0: i32, %arg1: i32) -> (i32, i32, i32) {
    %c0_i32 = arith.constant 0 : i32
    %c0_i32_0 = arith.constant 0 : i32
    return %arg0, %arg1, %c0_i32 : i32, i32, i32
  }
}

</mosaic_0001>

<llo_original>
// kernel: yolo_v3_dynamic_target_simple.1
$region0: #{yolo_v3_dynamic_target_simple.1}
  #allocation0 [shape = 'u32[]', space=smem, size = 0x4, offset = 0x4, fixed_abs, tag = 'smem constant byte address 0x4 - core index']
  #allocation1 [shape = 'u32[144,128]{1,0:T(1,128)}', space=vmem, size = 0x12000, scoped, tag = 'internal scratch']
  %s0 = inlined_call_operand.vmem [shape: f32[2,32], index: 0, kind: input, shape index: {}]
  %s1 = inlined_call_operand.vmem [shape: f32[2,4,1,128], index: 1, kind: input, shape index: {}]
  %s2 = inlined_call_operand.hbm [shape: f32[2,1,128], index: 2, kind: output, shape index: {}]
  %s3 = sld [smem:[#allocation0]]
  $region45: #{yolo_v3_dynamic_target_simple.1} parent=0
    _
  %s5 = ssub.s32 1, %s3
  %s6 = scalar_select 0, %s5, %s3
  $region1: #{yolo_v3_dynamic_target_simple.1} parent=0
    #allocation2 [shape = 'u8[1024]{0}', space=smem, size = 0x400, scoped, tag = 'input window, operand 0, single buffered']
    #allocation3 [shape = 's32[2]{0}', space=sflag, size = 0x8, scoped, tag = 'scoped memory for yolo_v3_dynamic_target_simple.1']
    #allocation4 [shape = 's32[2]{0}', space=sflag, size = 0x8, scoped, tag = 'scoped memory for yolo_v3_dynamic_target_simple.1']
    #allocation5 [shape = 'u8[1024]{0}', space=vmem, size = 0x400, scoped, tag = 'output window, operand 0']
    %7 = vsyncpa [#allocation4], 0
    %8 = vsyncpa [#allocation3], 0
    %s9 = scalar_lea.sflag [#allocation3], 1
    %10 = vsyncpa %s9, 0
    loop: start=0, step=1, limit=4
    $region2: #{yolo_v3_dynamic_target_simple.1} parent=1 // loop_pre_header
      _
    $region3: #{yolo_v3_dynamic_target_simple.1} parent=1 // loop_header
      %s12 = sphi 0, %s16
      %p13 = scmp.ge.s32.totalorder %s12, 4
      %s19 = sphi 0, %s31
      %s20 = sphi 0, %s27
      %s21 = sphi 0, %s19
      %s22 = sphi 0, %s20
      %s23 = sphi 0, %s21
      %s24 = sphi 0, %s22
      %s32 = sphi 0, %s32
      %s34 = sphi 0, %s32
      %s35 = sphi 0, %s34
      %s49 = sphi 0, %s35
      %s57 = sphi 0, %s59
      %s60 = sphi 0, %s57
      %s61 = sphi 0, %s60
      %s77 = sphi 0, %s61
      %s85 = sphi 0, %s87
      %s88 = sphi 0, %s85
      %s89 = sphi 0, %s88
      %s105 = sphi 0, %s89
    $region4: #{yolo_v3_dynamic_target_simple.1} parent=1 // loop_header_branch
      %15 = sbr.rel (%p13) target = $region8
    $region5: #{yolo_v3_dynamic_target_simple.1} parent=1 // loop_body
      %s17 = ssub.s32 %s12, 1
      %s18 = ssub.s32 %s12, 2
      %s25 = sadd.s32 1, %s20
      %p26 = scmp.ge.s32.totalorder %s25, 1
      %s27 = scalar_select %p26, 0, %s25
      %s28 = sadd.s32 1, %s19
      %s29 = scalar_select %p26, %s28, %s19
      %p30 = scmp.ge.s32.totalorder %s29, 2
      %s31 = scalar_select %p30, 0, %s29
      %s33 = sadd.s32 %s32, 1
      %p36 = scmp.eq.s32.totalorder %s12, 1
      %p37 = scmp.ne.s32.totalorder %s32, %s34
      %p38 = scmp.eq.s32.totalorder %s12, 0
      %p39 = por %p37, %p38
      %p40 = scmp.ne.s32.totalorder %s32, %s34
      %p41 = scmp.eq.s32.totalorder %s17, 1
      %p42 = por %p40, %p41
      %p43 = scmp.ne.s32.totalorder %s34, %s35
      %p44 = scmp.eq.s32.totalorder %s17, 0
      %p45 = por %p43, %p44
      %p46 = scmp.ne.s32.totalorder %s34, %s35
      %p47 = scmp.eq.s32.totalorder %s18, 1
      %p48 = por %p46, %p47
      %p50 = scmp.ne.s32.totalorder %s35, %s49
      %p51 = scmp.eq.s32.totalorder %s18, 0
      %p52 = por %p50, %p51
      %s53 = ssub.s32 %s19, %s31
      %s54 = ssub.s32 %s20, %s27
      %s55 = sor.u32 %s53, %s54
      %p56 = scmp.eq.s32.totalorder %s55, 0
      %s58 = sadd.s32 %s57, 1
      %s59 = scalar_select %p56, %s57, %s58
      %p62 = pneg %p56
      %p63 = scmp.eq.s32.totalorder %s12, 1
      %p64 = por %p62, %p63
      %p65 = scmp.ne.s32.totalorder %s57, %s60
      %p66 = scmp.eq.s32.totalorder %s12, 0
      %p67 = por %p65, %p66
      %p68 = scmp.ne.s32.totalorder %s57, %s60
      %p69 = scmp.eq.s32.totalorder %s17, 1
      %p70 = por %p68, %p69
      %p71 = scmp.ne.s32.totalorder %s60, %s61
      %p72 = scmp.eq.s32.totalorder %s17, 0
      %p73 = por %p71, %p72
      %p74 = scmp.ne.s32.totalorder %s60, %s61
      %p75 = scmp.eq.s32.totalorder %s18, 1
      %p76 = por %p74, %p75
      %p78 = scmp.ne.s32.totalorder %s61, %s77
      %p79 = scmp.eq.s32.totalorder %s18, 0
      %p80 = por %p78, %p79
      %s81 = ssub.s32 %s19, %s31
      %s82 = ssub.s32 %s20, %s27
      %s83 = sor.u32 %s81, %s82
      %p84 = scmp.eq.s32.totalorder %s83, 0
      %s86 = sadd.s32 %s85, 1
      %s87 = scalar_select %p84, %s85, %s86
      %p90 = pneg %p84
      %p91 = scmp.eq.s32.totalorder %s12, 1
      %p92 = por %p90, %p91
      %p93 = scmp.ne.s32.totalorder %s85, %s88
      %p94 = scmp.eq.s32.totalorder %s12, 0
      %p95 = por %p93, %p94
      %p96 = scmp.ne.s32.totalorder %s85, %s88
      %p97 = scmp.eq.s32.totalorder %s17, 1
      %p98 = por %p96, %p97
      %p99 = scmp.ne.s32.totalorder %s88, %s89
      %p100 = scmp.eq.s32.totalorder %s17, 0
      %p101 = por %p99, %p100
      %p102 = scmp.ne.s32.totalorder %s88, %s89
      %p103 = scmp.eq.s32.totalorder %s18, 1
      %p104 = por %p102, %p103
      %p106 = scmp.ne.s32.totalorder %s89, %s105
      %p107 = scmp.eq.s32.totalorder %s18, 0
      %p108 = por %p106, %p107
      %p109 = scmp.le.s32.totalorder 1, %s12
      %p110 = scmp.lt.s32.totalorder %s12, 3
      %p111 = pnand %p109, %p110
      %p112 = pneg %p111
      // Predicated region
      $region9: #{yolo_v3_dynamic_target_simple.1} parent=5 // pred_check
        _
      $region10: #{yolo_v3_dynamic_target_simple.1} parent=5 // pred_check_branch
        %114 = sbr.rel (%p111) target = $region12
      $region11: #{yolo_v3_dynamic_target_simple.1} parent=5 // pred_region
        %s115 = ssub.s32 %s12, 1
        // Predicated region
        $region13: #{yolo_v3_dynamic_target_simple.1} parent=11 // pred_check
          %p116 = pneg %p45
        $region14: #{yolo_v3_dynamic_target_simple.1} parent=11 // pred_check_branch
          %118 = sbr.rel (%p116) target = $region16
        $region15: #{yolo_v3_dynamic_target_simple.1} parent=11 // pred_region
          %s120 = ssub.s32 32, 32
          %121 = vsyncadd [#allocation4], %s120
          %s123 = sshll.u32 %s0, 4
          %s124 = int_to_ptr.vmem [resolvable:$true] %s123
          %126 = dma.vmem_to_smem %s124, 32, [#allocation2], [#allocation4]
        $region16: #{yolo_v3_dynamic_target_simple.1} parent=11 // pred_fallthru
          _
      $region12: #{yolo_v3_dynamic_target_simple.1} parent=5 // pred_fallthru
        _
      %p127 = scmp.lt.s32.totalorder %s12, 2
      // Predicated region
      $region17: #{yolo_v3_dynamic_target_simple.1} parent=5 // pred_check
        %p128 = pneg %p127
      $region18: #{yolo_v3_dynamic_target_simple.1} parent=5 // pred_check_branch
        %130 = sbr.rel (%p128) target = $region20
      $region19: #{yolo_v3_dynamic_target_simple.1} parent=5 // pred_region
        // Predicated region
        $region21: #{yolo_v3_dynamic_target_simple.1} parent=19 // pred_check
          %p131 = pneg %p67
        $region22: #{yolo_v3_dynamic_target_simple.1} parent=19 // pred_check_branch
          %133 = sbr.rel (%p131) target = $region24
        $region23: #{yolo_v3_dynamic_target_simple.1} parent=19 // pred_region
          %p134 = scmp.lt.s32.totalorder %s19, 1
          %s135 = scalar_select %p134, %s19, 1
          %p136 = scmp.lt.s32.totalorder %s20, 0
          %s137 = scalar_select %p136, %s20, 0
          %s138 = smul.addr %s135, 4
          %s139 = sadd.s32 %s137, %s138
          %s140 = scalar_lea.vmem %s1, %s139
        $region24: #{yolo_v3_dynamic_target_simple.1} parent=19 // pred_fallthru
          _
      $region20: #{yolo_v3_dynamic_target_simple.1} parent=5 // pred_fallthru
        _
      %p141 = scmp.le.s32.totalorder 1, %s12
      %p142 = scmp.lt.s32.totalorder %s12, 3
      %p143 = pnand %p141, %p142
      %p144 = pneg %p143
      // Predicated region
      $region25: #{yolo_v3_dynamic_target_simple.1} parent=5 // pred_check
        _
      $region26: #{yolo_v3_dynamic_target_simple.1} parent=5 // pred_check_branch
        %146 = sbr.rel (%p143) target = $region28
      $region27: #{yolo_v3_dynamic_target_simple.1} parent=5 // pred_region
        %s147 = ssub.s32 %s12, 1
        // Predicated region
        $region29: #{yolo_v3_dynamic_target_simple.1} parent=27 // pred_check
          %p148 = pneg %p45
        $region30: #{yolo_v3_dynamic_target_simple.1} parent=27 // pred_check_branch
          %150 = sbr.rel (%p148) target = $region32
        $region31: #{yolo_v3_dynamic_target_simple.1} parent=27 // pred_region
          %151 = dma.done [#allocation4], 32
        $region32: #{yolo_v3_dynamic_target_simple.1} parent=27 // pred_fallthru
          _
        %152 = sfence
        %p153 = pneg %p45
        %p154 = pneg %p42
        %p155 = scmp.lt.s32.totalorder %s21, 1
        %s156 = scalar_select %p155, %s21, 1
        %p157 = scmp.lt.s32.totalorder %s22, 0
        %s158 = scalar_select %p157, %s22, 0
        %s159 = smul.addr %s156, 4
        %s160 = sadd.s32 %s158, %s159
        %s161 = scalar_lea.vmem %s1, %s160
        %p162 = pneg %p73
        %p163 = pneg %p70
        %p164 = pneg %p101
        %p165 = pneg %p98
        %s166 = sand.u32 %s88, 1
        %s167 = scalar_lea.sflag [#allocation3], %s166
        %s168 = sand.u32 %s88, 1
        %s169 = scalar_lea.vmem [#allocation5], %s168
        %p170 = scmp.lt.s32.totalorder %s21, 1
        %s171 = scalar_select %p170, %s21, 1
        %p172 = scmp.lt.s32.totalorder %s22, 0
        %s173 = scalar_select %p172, %s22, 0
        %s174 = smul.addr %s171, 4
        %s175 = sadd.s32 %s173, %s174
        %s176 = scalar_lea.vmem %s1, %s175
        %v177 = vld [vmem:[%s176] sm:$0x1]
        %s178 = scalar_lea.vmem %s176, 1
        %v179 = vld [vmem:[%s178] sm:$0x1]
        %s180 = scalar_lea.vmem %s176, 2
        %v181 = vld [vmem:[%s180] sm:$0x1]
        %s182 = scalar_lea.vmem %s176, 3
        %v183 = vld [vmem:[%s182] sm:$0x1]
        %v184 = vsub.f32 %v181, %v177
        %v185 = vsub.f32 %v183, %v179
        %v186 = vmul.f32 %v184, %v185
        %s187 = smul.u32 %s21, 128
        %s188 = sld [smem:[#allocation2 + %s187]]
        %s189 = sadd.s32 %s187, 1
        %s190 = sld [smem:[#allocation2 + %s189]]
        %s191 = sadd.s32 %s187, 2
        %s192 = sld [smem:[#allocation2 + %s191]]
        %s193 = sadd.s32 %s187, 3
        %s194 = sld [smem:[#allocation2 + %s193]]
        %v195 = vstv %s192
        %v196 = vmin.f32 %v181, %v195
        %v197 = vstv %s188
        %v198 = vmax.f32 %v177, %v197
        %v199 = vsub.f32 %v196, %v198
        %v200 = vmax.f32 %v199, 0.0
        %v201 = vstv %s194
        %v202 = vmin.f32 %v183, %v201
        %v203 = vstv %s190
        %v204 = vmax.f32 %v179, %v203
        %v205 = vsub.f32 %v202, %v204
        %v206 = vmax.f32 %v205, 0.0
        %v207 = vmul.f32 %v200, %v206
        %s208 = ssub.f32 %s192, %s188
        %s209 = ssub.f32 %s194, %s190
        %s210 = smul.f32 %s208, %s209
        %v211 = vstv %s210
        %v212 = vadd.f32 %v186, %v211
        %v213 = vsub.f32 %v212, %v207
        %v214 = vadd.f32 %v213, 1e-15
        %v215 = vmul.f32 %v214, 0.5
        %v216 = vsub.f32 %v207, %v215
        %s217 = sadd.s32 %s187, 4
        %s218 = sld [smem:[#allocation2 + %s217]]
        %s219 = sadd.s32 %s187, 5
        %s220 = sld [smem:[#allocation2 + %s219]]
        %s221 = sadd.s32 %s187, 6
        %s222 = sld [smem:[#allocation2 + %s221]]
        %s223 = sadd.s32 %s187, 7
        %s224 = sld [smem:[#allocation2 + %s223]]
        %v225 = vstv %s222
        %v226 = vmin.f32 %v181, %v225
        %v227 = vstv %s218
        %v228 = vmax.f32 %v177, %v227
        %v229 = vsub.f32 %v226, %v228
        %v230 = vmax.f32 %v229, 0.0
        %v231 = vstv %s224
        %v232 = vmin.f32 %v183, %v231
        %v233 = vstv %s220
        %v234 = vmax.f32 %v179, %v233
        %v235 = vsub.f32 %v232, %v234
        %v236 = vmax.f32 %v235, 0.0
        %v237 = vmul.f32 %v230, %v236
        %s238 = ssub.f32 %s222, %s218
        %s239 = ssub.f32 %s224, %s220
        %s240 = smul.f32 %s238, %s239
        %v241 = vstv %s240
        %v242 = vadd.f32 %v186, %v241
        %v243 = vsub.f32 %v242, %v237
        %v244 = vadd.f32 %v243, 1e-15
        %v245 = vmul.f32 %v244, 0.5
        %v246 = vsub.f32 %v237, %v245
        %v247 = vmax.f32 %v216, %v246
        %s248 = sadd.s32 %s187, 8
        %s249 = sld [smem:[#allocation2 + %s248]]
        %s250 = sadd.s32 %s187, 9
        %s251 = sld [smem:[#allocation2 + %s250]]
        %s252 = sadd.s32 %s187, 10
        %s253 = sld [smem:[#allocation2 + %s252]]
        %s254 = sadd.s32 %s187, 11
        %s255 = sld [smem:[#allocation2 + %s254]]
        %v256 = vstv %s253
        %v257 = vmin.f32 %v181, %v256
        %v258 = vstv %s249
        %v259 = vmax.f32 %v177, %v258
        %v260 = vsub.f32 %v257, %v259
        %v261 = vmax.f32 %v260, 0.0
        %v262 = vstv %s255
        %v263 = vmin.f32 %v183, %v262
        %v264 = vstv %s251
        %v265 = vmax.f32 %v179, %v264
        %v266 = vsub.f32 %v263, %v265
        %v267 = vmax.f32 %v266, 0.0
        %v268 = vmul.f32 %v261, %v267
        %s269 = ssub.f32 %s253, %s249
        %s270 = ssub.f32 %s255, %s251
        %s271 = smul.f32 %s269, %s270
        %v272 = vstv %s271
        %v273 = vadd.f32 %v186, %v272
        %v274 = vsub.f32 %v273, %v268
        %v275 = vadd.f32 %v274, 1e-15
        %v276 = vmul.f32 %v275, 0.5
        %v277 = vsub.f32 %v268, %v276
        %v278 = vmax.f32 %v247, %v277
        %s279 = sadd.s32 %s187, 12
        %s280 = sld [smem:[#allocation2 + %s279]]
        %s281 = sadd.s32 %s187, 13
        %s282 = sld [smem:[#allocation2 + %s281]]
        %s283 = sadd.s32 %s187, 14
        %s284 = sld [smem:[#allocation2 + %s283]]
        %s285 = sadd.s32 %s187, 15
        %s286 = sld [smem:[#allocation2 + %s285]]
        %v287 = vstv %s284
        %v288 = vmin.f32 %v181, %v287
        %v289 = vstv %s280
        %v290 = vmax.f32 %v177, %v289
        %v291 = vsub.f32 %v288, %v290
        %v292 = vmax.f32 %v291, 0.0
        %v293 = vstv %s286
        %v294 = vmin.f32 %v183, %v293
        %v295 = vstv %s282
        %v296 = vmax.f32 %v179, %v295
        %v297 = vsub.f32 %v294, %v296
        %v298 = vmax.f32 %v297, 0.0
        %v299 = vmul.f32 %v292, %v298
        %s300 = ssub.f32 %s284, %s280
        %s301 = ssub.f32 %s286, %s282
        %s302 = smul.f32 %s300, %s301
        %v303 = vstv %s302
        %v304 = vadd.f32 %v186, %v303
        %v305 = vsub.f32 %v304, %v299
        %v306 = vadd.f32 %v305, 1e-15
        %v307 = vmul.f32 %v306, 0.5
        %v308 = vsub.f32 %v299, %v307
        %v309 = vmax.f32 %v278, %v308
        %s310 = sadd.s32 %s187, 16
        %s311 = sld [smem:[#allocation2 + %s310]]
        %s312 = sadd.s32 %s187, 17
        %s313 = sld [smem:[#allocation2 + %s312]]
        %s314 = sadd.s32 %s187, 18
        %s315 = sld [smem:[#allocation2 + %s314]]
        %s316 = sadd.s32 %s187, 19
        %s317 = sld [smem:[#allocation2 + %s316]]
        %v318 = vstv %s315
        %v319 = vmin.f32 %v181, %v318
        %v320 = vstv %s311
        %v321 = vmax.f32 %v177, %v320
        %v322 = vsub.f32 %v319, %v321
        %v323 = vmax.f32 %v322, 0.0
        %v324 = vstv %s317
        %v325 = vmin.f32 %v183, %v324
        %v326 = vstv %s313
        %v327 = vmax.f32 %v179, %v326
        %v328 = vsub.f32 %v325, %v327
        %v329 = vmax.f32 %v328, 0.0
        %v330 = vmul.f32 %v323, %v329
        %s331 = ssub.f32 %s315, %s311
        %s332 = ssub.f32 %s317, %s313
        %s333 = smul.f32 %s331, %s332
        %v334 = vstv %s333
        %v335 = vadd.f32 %v186, %v334
        %v336 = vsub.f32 %v335, %v330
        %v337 = vadd.f32 %v336, 1e-15
        %v338 = vmul.f32 %v337, 0.5
        %v339 = vsub.f32 %v330, %v338
        %v340 = vmax.f32 %v309, %v339
        %s341 = sadd.s32 %s187, 20
        %s342 = sld [smem:[#allocation2 + %s341]]
        %s343 = sadd.s32 %s187, 21
        %s344 = sld [smem:[#allocation2 + %s343]]
        %s345 = sadd.s32 %s187, 22
        %s346 = sld [smem:[#allocation2 + %s345]]
        %s347 = sadd.s32 %s187, 23
        %s348 = sld [smem:[#allocation2 + %s347]]
        %v349 = vstv %s346
        %v350 = vmin.f32 %v181, %v349
        %v351 = vstv %s342
        %v352 = vmax.f32 %v177, %v351
        %v353 = vsub.f32 %v350, %v352
        %v354 = vmax.f32 %v353, 0.0
        %v355 = vstv %s348
        %v356 = vmin.f32 %v183, %v355
        %v357 = vstv %s344
        %v358 = vmax.f32 %v179, %v357
        %v359 = vsub.f32 %v356, %v358
        %v360 = vmax.f32 %v359, 0.0
        %v361 = vmul.f32 %v354, %v360
        %s362 = ssub.f32 %s346, %s342
        %s363 = ssub.f32 %s348, %s344
        %s364 = smul.f32 %s362, %s363
        %v365 = vstv %s364
        %v366 = vadd.f32 %v186, %v365
        %v367 = vsub.f32 %v366, %v361
        %v368 = vadd.f32 %v367, 1e-15
        %v369 = vmul.f32 %v368, 0.5
        %v370 = vsub.f32 %v361, %v369
        %v371 = vmax.f32 %v340, %v370
        %s372 = sadd.s32 %s187, 24
        %s373 = sld [smem:[#allocation2 + %s372]]
        %s374 = sadd.s32 %s187, 25
        %s375 = sld [smem:[#allocation2 + %s374]]
        %s376 = sadd.s32 %s187, 26
        %s377 = sld [smem:[#allocation2 + %s376]]
        %s378 = sadd.s32 %s187, 27
        %s379 = sld [smem:[#allocation2 + %s378]]
        %v380 = vstv %s377
        %v381 = vmin.f32 %v181, %v380
        %v382 = vstv %s373
        %v383 = vmax.f32 %v177, %v382
        %v384 = vsub.f32 %v381, %v383
        %v385 = vmax.f32 %v384, 0.0
        %v386 = vstv %s379
        %v387 = vmin.f32 %v183, %v386
        %v388 = vstv %s375
        %v389 = vmax.f32 %v179, %v388
        %v390 = vsub.f32 %v387, %v389
        %v391 = vmax.f32 %v390, 0.0
        %v392 = vmul.f32 %v385, %v391
        %s393 = ssub.f32 %s377, %s373
        %s394 = ssub.f32 %s379, %s375
        %s395 = smul.f32 %s393, %s394
        %v396 = vstv %s395
        %v397 = vadd.f32 %v186, %v396
        %v398 = vsub.f32 %v397, %v392
        %v399 = vadd.f32 %v398, 1e-15
        %v400 = vmul.f32 %v399, 0.5
        %v401 = vsub.f32 %v392, %v400
        %v402 = vmax.f32 %v371, %v401
        %s403 = sadd.s32 %s187, 28
        %s404 = sld [smem:[#allocation2 + %s403]]
        %s405 = sadd.s32 %s187, 29
        %s406 = sld [smem:[#allocation2 + %s405]]
        %s407 = sadd.s32 %s187, 30
        %s408 = sld [smem:[#allocation2 + %s407]]
        %s409 = sadd.s32 %s187, 31
        %s410 = sld [smem:[#allocation2 + %s409]]
        %v411 = vstv %s408
        %v412 = vmin.f32 %v181, %v411
        %v413 = vstv %s404
        %v414 = vmax.f32 %v177, %v413
        %v415 = vsub.f32 %v412, %v414
        %v416 = vmax.f32 %v415, 0.0
        %v417 = vstv %s410
        %v418 = vmin.f32 %v183, %v417
        %v419 = vstv %s406
        %v420 = vmax.f32 %v179, %v419
        %v421 = vsub.f32 %v418, %v420
        %v422 = vmax.f32 %v421, 0.0
        %v423 = vmul.f32 %v416, %v422
        %s424 = ssub.f32 %s408, %s404
        %s425 = ssub.f32 %s410, %s406
        %s426 = smul.f32 %s424, %s425
        %v427 = vstv %s426
        %v428 = vadd.f32 %v186, %v427
        %v429 = vsub.f32 %v428, %v423
        %v430 = vadd.f32 %v429, 1e-15
        %v431 = vmul.f32 %v430, 0.5
        %v432 = vsub.f32 %v423, %v431
        %v433 = vmax.f32 %v402, %v432
        %vm434 = vcmp.gt.f32.partialorder %v433, 0.0
        %v435 = vsel %vm434, -1.0, 0.0
        %436 = vst [vmem:[%s169] sm:$0x1] %v435
        %s437 = sand.u32 %s88, 1
        %s438 = scalar_lea.sflag [#allocation3], %s437
        %s439 = sand.u32 %s88, 1
        %s440 = scalar_lea.vmem [#allocation5], %s439
        // Predicated region
        $region33: #{yolo_v3_dynamic_target_simple.1} parent=27 // pred_check
          %p441 = pneg %p98
        $region34: #{yolo_v3_dynamic_target_simple.1} parent=27 // pred_check_branch
          %443 = sbr.rel (%p441) target = $region36
        $region35: #{yolo_v3_dynamic_target_simple.1} parent=27 // pred_region
          %s445 = ssub.s32 16, 16
          %446 = vsyncadd %s438, %s445
          %s447 = sadd.s32 %s22, %s21
          %s448 = smul.addr %s447, 16
          %s449 = scalar_lea.hbm %s2, %s448
          %s451 = sshll.u32 %s440, 4
          %s452 = int_to_ptr.vmem [resolvable:$true] %s451
          %454 = dma.vmem_to_hbm [thread:$0]  %s452, 16, %s449, %s438
        $region36: #{yolo_v3_dynamic_target_simple.1} parent=27 // pred_fallthru
          _
      $region28: #{yolo_v3_dynamic_target_simple.1} parent=5 // pred_fallthru
        _
      %p455 = scmp.le.s32.totalorder 2, %s12
      // Predicated region
      $region37: #{yolo_v3_dynamic_target_simple.1} parent=5 // pred_check
        %p456 = pneg %p455
      $region38: #{yolo_v3_dynamic_target_simple.1} parent=5 // pred_check_branch
        %458 = sbr.rel (%p456) target = $region40
      $region39: #{yolo_v3_dynamic_target_simple.1} parent=5 // pred_region
        %s459 = ssub.s32 %s12, 2
        // Predicated region
        $region41: #{yolo_v3_dynamic_target_simple.1} parent=39 // pred_check
          %p460 = pneg %p104
        $region42: #{yolo_v3_dynamic_target_simple.1} parent=39 // pred_check_branch
          %462 = sbr.rel (%p460) target = $region44
        $region43: #{yolo_v3_dynamic_target_simple.1} parent=39 // pred_region
          %s463 = sand.u32 %s89, 1
          %s464 = scalar_lea.sflag [#allocation3], %s463
          %s465 = sand.u32 %s89, 1
          %s466 = scalar_lea.vmem [#allocation5], %s465
          %467 = dma.done %s464, 16
        $region44: #{yolo_v3_dynamic_target_simple.1} parent=39 // pred_fallthru
          _
      $region40: #{yolo_v3_dynamic_target_simple.1} parent=5 // pred_fallthru
        _
    $region6: #{yolo_v3_dynamic_target_simple.1} parent=1 // loop_footer
      %s16 = sadd.s32 1, %s12
    $region7: #{yolo_v3_dynamic_target_simple.1} parent=1 // loop_footer_branch
      %11 = sbr.rel target = $region3
    $region8: #{yolo_v3_dynamic_target_simple.1} parent=1 // loop_exit
      _
    %468 = vsyncpa [#allocation3], 1
    %s469 = scalar_lea.sflag [#allocation3], 1
    %470 = vsyncpa %s469, 1
    %471 = vsyncpa [#allocation4], 1
    %s472 = scalar_lea.sflag [#allocation4], 1
    %473 = vsyncpa %s472, 1

</llo_original>
